<compile_context>
chip_gen: v7x
topology: tpu7x:2x2x1
jax: 0.10.0
libtpu: 0.0.40
codegen_flags: <defaults>
</compile_context>

<pallas_src>
import math

import jax
import jax.numpy as jnp
from jax.experimental import pallas as pl
from jax.experimental.pallas import tpu as pltpu


def _mlp_kernel(x_ref, w1_ref, b1_ref, w2_ref, b2_ref, o_ref):
    # Hot path: both matmuls on the MXU (f32 accumulation), bias + ReLU on the
    # VPU in f32 (v5e has no bf16 VPU path).
    h = jnp.dot(x_ref[...], w1_ref[...], preferred_element_type=jnp.float32)
    h = jnp.maximum(h + b1_ref[...], 0.0)            # (bm, Hp) + (1, Hp), ReLU
    # Intentional cast: feed the second MXU dot in the weights' dtype.
    # No-op for f32 weights; bf16 weights => bf16 activations (documented
    # precision trade-off, accumulation still f32).
    h = h.astype(w2_ref.dtype)
    out = jnp.dot(h, w2_ref[...], preferred_element_type=jnp.float32)
    o_ref[...] = (out + b2_ref[...]).astype(o_ref.dtype)


def _round_up(n, m):
    return ((n + m - 1) // m) * m


def two_layer_mlp(x_nchw, w1, b1, w2, b2, *, weight_dtype=jnp.float32):
    """Runs Flatten -> Linear -> ReLU -> Linear as a single Pallas kernel.

    x_nchw: (B, C, H, W) float32
    w1: (I, H_hidden)  b1: (H_hidden,)
    w2: (H_hidden, O)  b2: (O,)
    weight_dtype: dtype for x / w1 / w2 inside the kernel (f32 or bf16).
                  Biases and accumulation stay f32.
    returns: (B, O) float32
    """
    B = x_nchw.shape[0]
    I, H = w1.shape
    O = w2.shape[1]

    # nn.Flatten: row-major flatten of (C, H, W) -> I; identical in JAX reshape.
    x2d = x_nchw.reshape(B, I).astype(jnp.float32)

    # Lane-aligned padded sizes (all zero-padded => numerically identical).
    Ip = _round_up(I, 128)
    Hp = _round_up(H, 128)
    Op = _round_up(O, 128)

    # Batch tile: 128 rows per MXU pass when the batch is large; otherwise just
    # round the tiny batch up to a sublane multiple (8).
    bm = 128 if B >= 128 else _round_up(B, 8)
    Bp = _round_up(B, bm)

    x_p = jnp.pad(x2d, ((0, Bp - B), (0, Ip - I))).astype(weight_dtype)
    w1_p = jnp.pad(w1, ((0, Ip - I), (0, Hp - H))).astype(weight_dtype)
    b1_p = jnp.pad(b1, (0, Hp - H)).reshape(1, Hp).astype(jnp.float32)
    w2_p = jnp.pad(w2, ((0, Hp - H), (0, Op - O))).astype(weight_dtype)
    b2_p = jnp.pad(b2, (0, Op - O)).reshape(1, Op).astype(jnp.float32)

    grid = (Bp // bm,)

    out = pl.pallas_call(
        _mlp_kernel,
        out_shape=jax.ShapeDtypeStruct((Bp, Op), jnp.float32),
        grid_spec=pltpu.PrefetchScalarGridSpec(
            num_scalar_prefetch=0,
            grid=grid,
            in_specs=[
                # x: tiled along batch.
                pl.BlockSpec((bm, Ip), lambda i: (i, 0)),
                # Weights / biases: same block on every step => VMEM-resident,
                # DMA'd once and amortized over all batch tiles.
                pl.BlockSpec((Ip, Hp), lambda i: (0, 0)),
                pl.BlockSpec((1, Hp), lambda i: (0, 0)),
                pl.BlockSpec((Hp, Op), lambda i: (0, 0)),
                pl.BlockSpec((1, Op), lambda i: (0, 0)),
            ],
            out_specs=pl.BlockSpec((bm, Op), lambda i: (i, 0)),
        ),
        compiler_params=pltpu.CompilerParams(
            # Batch axis is embarrassingly parallel -> shard across both
            # TensorCores on v7x; harmless on v5e/v6e.
            dimension_semantics=("parallel",),
        ),
    )(x_p, w1_p, b1_p, w2_p, b2_p)

    # Drop batch / output-lane padding.
    return out[:B, :O]


def init_params(key, input_features, hidden, output_features):
    """Deterministic init mimicking nn.Linear defaults (uniform +/- 1/sqrt(fan_in))."""
    k1, k2, k3, k4 = jax.random.split(key, 4)
    bound1 = 1.0 / math.sqrt(input_features)
    bound2 = 1.0 / math.sqrt(hidden)
    w1 = jax.random.uniform(k1, (input_features, hidden), jnp.float32, -bound1, bound1)
    b1 = jax.random.uniform(k2, (hidden,), jnp.float32, -bound1, bound1)
    w2 = jax.random.uniform(k3, (hidden, output_features), jnp.float32, -bound2, bound2)
    b2 = jax.random.uniform(k4, (output_features,), jnp.float32, -bound2, bound2)
    return w1, b1, w2, b2


if __name__ == "__main__":
    # Small shapes consistent with the module: x is (B, C, H, W) = (2, 4, 16, 16)
    # -> input_features = 4*16*16 = 1024, hidden_layers = 200 (module default),
    #    output_features = 10.
    B, C, Hs, Ws = 2, 4, 16, 16
    input_features = C * Hs * Ws
    hidden = 200
    output_features = 10

    key = jax.random.PRNGKey(0)
    kx, kp = jax.random.split(key)
    x = jax.random.normal(kx, (B, C, Hs, Ws), jnp.float32)
    w1, b1, w2, b2 = init_params(kp, input_features, hidden, output_features)

    # Reference in plain JAX (same math as the PyTorch module, f32).
    ref = jnp.maximum(x.reshape(B, -1) @ w1 + b1, 0.0) @ w2 + b2

    # Default f32 path: must match the f32 reference tightly.
    out = two_layer_mlp(x, w1, b1, w2, b2)
    out = jax.block_until_ready(out)
    assert out.shape == (B, output_features)
    assert jnp.allclose(out, ref, atol=1e-4, rtol=1e-4)

    # bf16-weight fast path (v6e/v7x HBM/MXU optimization): f32 accumulation,
    # looser tolerance against the f32 reference by construction.
    out_bf16 = two_layer_mlp(x, w1, b1, w2, b2, weight_dtype=jnp.bfloat16)
    out_bf16 = jax.block_until_ready(out_bf16)
    assert out_bf16.shape == (B, output_features)
    assert jnp.allclose(out_bf16, ref, atol=1e-1, rtol=1e-1)

    print("KERNEL_OK")
</pallas_src>

<mosaic_0001>
module attributes {stable_mosaic.version = 11 : i64} {
  func.func @_mlp_kernel(%arg0: i32, %arg1: memref<8x1024xf32, #tpu.memory_space<vmem>>, %arg2: memref<1024x256xf32, #tpu.memory_space<vmem>>, %arg3: memref<1x256xf32, #tpu.memory_space<vmem>>, %arg4: memref<256x128xf32, #tpu.memory_space<vmem>>, %arg5: memref<1x128xf32, #tpu.memory_space<vmem>>, %arg6: memref<8x128xf32, #tpu.memory_space<vmem>>) attributes {dimension_semantics = [#tpu.dimension_semantics<parallel>], iteration_bounds = array<i64: 1>, scalar_prefetch = 0 : i64, scratch_operands = 0 : i64, tpu.core_type = #tpu.core_type<tc>, window_params = [{transform_indices = @transform_0, window_bounds = array<i64: 8, 1024>}, {pipeline_mode = #tpu.pipeline_mode<synchronous>, transform_indices = @transform_1, window_bounds = array<i64: 1024, 256>}, {pipeline_mode = #tpu.pipeline_mode<synchronous>, transform_indices = @transform_2, window_bounds = array<i64: 1, 256>}, {pipeline_mode = #tpu.pipeline_mode<synchronous>, transform_indices = @transform_3, window_bounds = array<i64: 256, 128>}, {pipeline_mode = #tpu.pipeline_mode<synchronous>, transform_indices = @transform_4, window_bounds = array<i64: 1, 128>}, {transform_indices = @transform_5, window_bounds = array<i64: 8, 128>}]} {
    %c0 = arith.constant 0 : index
    %c0_0 = arith.constant 0 : index
    %0 = vector.load %arg1[%c0, %c0_0] : memref<8x1024xf32, #tpu.memory_space<vmem>>, vector<8x1024xf32>
    %c0_1 = arith.constant 0 : index
    %c0_2 = arith.constant 0 : index
    %1 = vector.load %arg2[%c0_1, %c0_2] : memref<1024x256xf32, #tpu.memory_space<vmem>>, vector<1024x256xf32>
    %cst = arith.constant dense<0.000000e+00> : vector<8x256xf32>
    %2 = tpu.matmul %0, %1, %cst {dimension_numbers = #tpu.dot_dimension_numbers<[1], [0], [0], [1], [0, 0, 1, 1], [], []>} : vector<8x1024xf32>, vector<1024x256xf32>, vector<8x256xf32> -> vector<8x256xf32>
    %c0_3 = arith.constant 0 : index
    %c0_4 = arith.constant 0 : index
    %3 = vector.load %arg3[%c0_3, %c0_4] : memref<1x256xf32, #tpu.memory_space<vmem>>, vector<1x256xf32>
    %4 = vector.broadcast %3 : vector<1x256xf32> to vector<8x256xf32>
    %5 = arith.addf %2, %4 : vector<8x256xf32>
    %cst_5 = arith.constant 0.000000e+00 : f32
    %6 = vector.broadcast %cst_5 : f32 to vector<8x256xf32>
    %7 = arith.maximumf %5, %6 : vector<8x256xf32>
    %c0_6 = arith.constant 0 : index
    %c0_7 = arith.constant 0 : index
    %8 = vector.load %arg4[%c0_6, %c0_7] : memref<256x128xf32, #tpu.memory_space<vmem>>, vector<256x128xf32>
    %cst_8 = arith.constant dense<0.000000e+00> : vector<8x128xf32>
    %9 = tpu.matmul %7, %8, %cst_8 {dimension_numbers = #tpu.dot_dimension_numbers<[1], [0], [0], [1], [0, 0, 1, 1], [], []>} : vector<8x256xf32>, vector<256x128xf32>, vector<8x128xf32> -> vector<8x128xf32>
    %c0_9 = arith.constant 0 : index
    %c0_10 = arith.constant 0 : index
    %10 = vector.load %arg5[%c0_9, %c0_10] : memref<1x128xf32, #tpu.memory_space<vmem>>, vector<1x128xf32>
    %11 = vector.broadcast %10 : vector<1x128xf32> to vector<8x128xf32>
    %12 = arith.addf %9, %11 : vector<8x128xf32>
    %c0_11 = arith.constant 0 : index
    %c0_12 = arith.constant 0 : index
    %13 = vector.load %arg6[%c0_11, %c0_12] : memref<8x128xf32, #tpu.memory_space<vmem>>, vector<8x128xf32>
    tpu.vector_store %arg6[%c0_11, %c0_12], %12 {strides = array<i32>} : memref<8x128xf32, #tpu.memory_space<vmem>>, vector<8x128xf32>,
    return
  }
  func.func @transform_0(%arg0: i32) -> (i32, i32) {
    %c0_i32 = arith.constant 0 : i32
    %c0_i32_0 = arith.constant 0 : i32
    return %arg0, %c0_i32 : i32, i32
  }
  func.func @transform_1(%arg0: i32) -> (i32, i32) {
    %c0_i32 = arith.constant 0 : i32
    %c0_i32_0 = arith.constant 0 : i32
    %c0_i32_1 = arith.constant 0 : i32
    return %c0_i32, %c0_i32_0 : i32, i32
  }
  func.func @transform_2(%arg0: i32) -> (i32, i32) {
    %c0_i32 = arith.constant 0 : i32
    %c0_i32_0 = arith.constant 0 : i32
    %c0_i32_1 = arith.constant 0 : i32
    return %c0_i32, %c0_i32_0 : i32, i32
  }
  func.func @transform_3(%arg0: i32) -> (i32, i32) {
    %c0_i32 = arith.constant 0 : i32
    %c0_i32_0 = arith.constant 0 : i32
    %c0_i32_1 = arith.constant 0 : i32
    return %c0_i32, %c0_i32_0 : i32, i32
  }
  func.func @transform_4(%arg0: i32) -> (i32, i32) {
    %c0_i32 = arith.constant 0 : i32
    %c0_i32_0 = arith.constant 0 : i32
    %c0_i32_1 = arith.constant 0 : i32
    return %c0_i32, %c0_i32_0 : i32, i32
  }
  func.func @transform_5(%arg0: i32) -> (i32, i32) {
    %c0_i32 = arith.constant 0 : i32
    %c0_i32_0 = arith.constant 0 : i32
    return %arg0, %c0_i32 : i32, i32
  }
}

</mosaic_0001>

<llo_original>
// kernel: tpu_custom_call.1
$region0: #{tpu_custom_call.1}
  #allocation0 [shape = 'u32[]', space=smem, size = 0x4, offset = 0x4, fixed_abs, tag = 'smem constant byte address 0x4 - core index']
  #allocation1 [shape = 'u32[144,128]{1,0:T(1,128)}', space=vmem, size = 0x12000, scoped, tag = 'internal scratch']
  %s0 = inlined_call_operand.hbm [shape: f32[8,1024], index: 0, kind: input, shape index: {}]
  %s1 = inlined_call_operand.hbm [shape: f32[1024,256], index: 1, kind: input, shape index: {}]
  %s2 = inlined_call_operand.vmem [shape: f32[1,256], index: 2, kind: input, shape index: {}]
  %s3 = inlined_call_operand.hbm [shape: f32[256,128], index: 3, kind: input, shape index: {}]
  %s4 = inlined_call_operand.vmem [shape: f32[1,128], index: 4, kind: input, shape index: {}]
  %s5 = inlined_call_operand.hbm [shape: f32[8,128], index: 5, kind: output, shape index: {}]
  %s6 = sld [smem:[#allocation0]]
  $region42: #{tpu_custom_call.1} parent=0
    _
  %s8 = ssub.s32 1, %s6
  %s9 = scalar_select 0, %s8, %s6
  $region1: #{tpu_custom_call.1} parent=0
    #allocation2 [shape = 'u8[32768]{0}', space=vmem, size = 0x8000, scoped, tag = 'input window, operand 0, single buffered']
    #allocation3 [shape = 's32[1]{0}', space=sflag, size = 0x4, scoped, tag = 'scoped memory for tpu_custom_call.1']
    #allocation4 [shape = 's32[1]{0}', space=sflag, size = 0x4, scoped, tag = 'scoped memory for tpu_custom_call.1']
    #allocation5 [shape = 'u8[1048576]{0}', space=vmem, size = 0x100000, scoped, tag = 'input window, operand 1, single buffered']
    #allocation6 [shape = 's32[1]{0}', space=sflag, size = 0x4, scoped, tag = 'scoped memory for tpu_custom_call.1']
    #allocation7 [shape = 'u8[131072]{0}', space=vmem, size = 0x20000, scoped, tag = 'input window, operand 3, single buffered']
    #allocation8 [shape = 'u8[4096]{0}', space=vmem, size = 0x1000, scoped, tag = 'output window, operand 0, single buffered']
    %10 = vsyncpa [#allocation3], 0
    %11 = vsyncpa [#allocation6], 0
    %12 = vsyncpa [#allocation4], 0
    // Predicated region
    $region2: #{tpu_custom_call.1} parent=1 // pred_check
      _
    $region3: #{tpu_custom_call.1} parent=1 // pred_check_branch
      %14 = sbr.rel (0) target = $region5
    $region4: #{tpu_custom_call.1} parent=1 // pred_region
      %s16 = ssub.s32 1024, 1024
      %17 = vsyncadd [#allocation3], %s16
      %s19 = sshll.u32 [#allocation2], 4
      %s20 = int_to_ptr.vmem [resolvable:$true] %s19
      %22 = dma.hbm_to_vmem [thread:$0]  %s0, 1024, %s20, [#allocation3]
    $region5: #{tpu_custom_call.1} parent=1 // pred_fallthru
      _
    // Predicated region
    $region6: #{tpu_custom_call.1} parent=1 // pred_check
      _
    $region7: #{tpu_custom_call.1} parent=1 // pred_check_branch
      %24 = sbr.rel (0) target = $region9
    $region8: #{tpu_custom_call.1} parent=1 // pred_region
      %s26 = ssub.s32 32768, 32768
      %27 = vsyncadd [#allocation6], %s26
      %s28 = sshll.u32 [#allocation5], 4
      %s29 = int_to_ptr.vmem [resolvable:$true] %s28
      %34 = dma.hbm_to_vmem [thread:$0]  %s1, 32768, %s29, [#allocation6], 256, 256, 16
    $region9: #{tpu_custom_call.1} parent=1 // pred_fallthru
      _
    // Predicated region
    $region10: #{tpu_custom_call.1} parent=1 // pred_check
      _
    $region11: #{tpu_custom_call.1} parent=1 // pred_check_branch
      %36 = sbr.rel (0) target = $region13
    $region12: #{tpu_custom_call.1} parent=1 // pred_region
      _
    $region13: #{tpu_custom_call.1} parent=1 // pred_fallthru
      _
    // Predicated region
    $region14: #{tpu_custom_call.1} parent=1 // pred_check
      _
    $region15: #{tpu_custom_call.1} parent=1 // pred_check_branch
      %38 = sbr.rel (0) target = $region17
    $region16: #{tpu_custom_call.1} parent=1 // pred_region
      %s40 = ssub.s32 4096, 4096
      %41 = vsyncadd [#allocation6], %s40
      %s42 = sshll.u32 [#allocation7], 4
      %s43 = int_to_ptr.vmem [resolvable:$true] %s42
      %48 = dma.hbm_to_vmem [thread:$0]  %s3, 4096, %s43, [#allocation6], 128, 128, 8
    $region17: #{tpu_custom_call.1} parent=1 // pred_fallthru
      _
    // Predicated region
    $region18: #{tpu_custom_call.1} parent=1 // pred_check
      _
    $region19: #{tpu_custom_call.1} parent=1 // pred_check_branch
      %50 = sbr.rel (0) target = $region21
    $region20: #{tpu_custom_call.1} parent=1 // pred_region
      _
    $region21: #{tpu_custom_call.1} parent=1 // pred_fallthru
      _
    // Predicated region
    $region22: #{tpu_custom_call.1} parent=1 // pred_check
      _
    $region23: #{tpu_custom_call.1} parent=1 // pred_check_branch
      %52 = sbr.rel (0) target = $region25
    $region24: #{tpu_custom_call.1} parent=1 // pred_region
      %53 = dma.done [#allocation3], 1024
    $region25: #{tpu_custom_call.1} parent=1 // pred_fallthru
      _
    // Predicated region
    $region26: #{tpu_custom_call.1} parent=1 // pred_check
      _
    $region27: #{tpu_custom_call.1} parent=1 // pred_check_branch
      %55 = sbr.rel (0) target = $region29
    $region28: #{tpu_custom_call.1} parent=1 // pred_region
      %56 = dma.done [#allocation6], 32768
    $region29: #{tpu_custom_call.1} parent=1 // pred_fallthru
      _
    // Predicated region
    $region30: #{tpu_custom_call.1} parent=1 // pred_check
      _
    $region31: #{tpu_custom_call.1} parent=1 // pred_check_branch
      %58 = sbr.rel (0) target = $region33
    $region32: #{tpu_custom_call.1} parent=1 // pred_region
      %59 = dma.done [#allocation6], 4096
    $region33: #{tpu_custom_call.1} parent=1 // pred_fallthru
      _
    %v60 = vld [vmem:[#allocation2] sm:$0xff]
    %v61 = vld [vmem:[#allocation2 + $0x8] sm:$0xff]
    %v62 = vld [vmem:[#allocation2 + $0x10] sm:$0xff]
    %v63 = vld [vmem:[#allocation2 + $0x18] sm:$0xff]
    %v64 = vld [vmem:[#allocation2 + $0x20] sm:$0xff]
    %v65 = vld [vmem:[#allocation2 + $0x28] sm:$0xff]
    %v66 = vld [vmem:[#allocation2 + $0x30] sm:$0xff]
    %v67 = vld [vmem:[#allocation2 + $0x38] sm:$0xff]
    %v68 = vld [vmem:[#allocation5] sm:$0xff]
    %v69 = vld [vmem:[#allocation5 + $0x8] sm:$0xff]
    %v70 = vld [vmem:[#allocation5 + $0x10] sm:$0xff]
    %v71 = vld [vmem:[#allocation5 + $0x18] sm:$0xff]
    %v72 = vld [vmem:[#allocation5 + $0x20] sm:$0xff]
    %v73 = vld [vmem:[#allocation5 + $0x28] sm:$0xff]
    %v74 = vld [vmem:[#allocation5 + $0x30] sm:$0xff]
    %v75 = vld [vmem:[#allocation5 + $0x38] sm:$0xff]
    %v76 = vld [vmem:[#allocation5 + $0x40] sm:$0xff]
    %v77 = vld [vmem:[#allocation5 + $0x48] sm:$0xff]
    %v78 = vld [vmem:[#allocation5 + $0x50] sm:$0xff]
    %v79 = vld [vmem:[#allocation5 + $0x58] sm:$0xff]
    %v80 = vld [vmem:[#allocation5 + $0x60] sm:$0xff]
    %v81 = vld [vmem:[#allocation5 + $0x68] sm:$0xff]
    %v82 = vld [vmem:[#allocation5 + $0x70] sm:$0xff]
    %v83 = vld [vmem:[#allocation5 + $0x78] sm:$0xff]
    %v84 = vld [vmem:[#allocation5 + $0x80] sm:$0xff]
    %v85 = vld [vmem:[#allocation5 + $0x88] sm:$0xff]
    %v86 = vld [vmem:[#allocation5 + $0x90] sm:$0xff]
    %v87 = vld [vmem:[#allocation5 + $0x98] sm:$0xff]
    %v88 = vld [vmem:[#allocation5 + $0xa0] sm:$0xff]
    %v89 = vld [vmem:[#allocation5 + $0xa8] sm:$0xff]
    %v90 = vld [vmem:[#allocation5 + $0xb0] sm:$0xff]
    %v91 = vld [vmem:[#allocation5 + $0xb8] sm:$0xff]
    %v92 = vld [vmem:[#allocation5 + $0xc0] sm:$0xff]
    %v93 = vld [vmem:[#allocation5 + $0xc8] sm:$0xff]
    %v94 = vld [vmem:[#allocation5 + $0xd0] sm:$0xff]
    %v95 = vld [vmem:[#allocation5 + $0xd8] sm:$0xff]
    %v96 = vld [vmem:[#allocation5 + $0xe0] sm:$0xff]
    %v97 = vld [vmem:[#allocation5 + $0xe8] sm:$0xff]
    %v98 = vld [vmem:[#allocation5 + $0xf0] sm:$0xff]
    %v99 = vld [vmem:[#allocation5 + $0xf8] sm:$0xff]
    %v100 = vld [vmem:[#allocation5 + $0x100] sm:$0xff]
    %v101 = vld [vmem:[#allocation5 + $0x108] sm:$0xff]
    %v102 = vld [vmem:[#allocation5 + $0x110] sm:$0xff]
    %v103 = vld [vmem:[#allocation5 + $0x118] sm:$0xff]
    %v104 = vld [vmem:[#allocation5 + $0x120] sm:$0xff]
    %v105 = vld [vmem:[#allocation5 + $0x128] sm:$0xff]
    %v106 = vld [vmem:[#allocation5 + $0x130] sm:$0xff]
    %v107 = vld [vmem:[#allocation5 + $0x138] sm:$0xff]
    %v108 = vld [vmem:[#allocation5 + $0x140] sm:$0xff]
    %v109 = vld [vmem:[#allocation5 + $0x148] sm:$0xff]
    %v110 = vld [vmem:[#allocation5 + $0x150] sm:$0xff]
    %v111 = vld [vmem:[#allocation5 + $0x158] sm:$0xff]
    %v112 = vld [vmem:[#allocation5 + $0x160] sm:$0xff]
    %v113 = vld [vmem:[#allocation5 + $0x168] sm:$0xff]
    %v114 = vld [vmem:[#allocation5 + $0x170] sm:$0xff]
    %v115 = vld [vmem:[#allocation5 + $0x178] sm:$0xff]
    %v116 = vld [vmem:[#allocation5 + $0x180] sm:$0xff]
    %v117 = vld [vmem:[#allocation5 + $0x188] sm:$0xff]
    %v118 = vld [vmem:[#allocation5 + $0x190] sm:$0xff]
    %v119 = vld [vmem:[#allocation5 + $0x198] sm:$0xff]
    %v120 = vld [vmem:[#allocation5 + $0x1a0] sm:$0xff]
    %v121 = vld [vmem:[#allocation5 + $0x1a8] sm:$0xff]
    %v122 = vld [vmem:[#allocation5 + $0x1b0] sm:$0xff]
    %v123 = vld [vmem:[#allocation5 + $0x1b8] sm:$0xff]
    %v124 = vld [vmem:[#allocation5 + $0x1c0] sm:$0xff]
    %v125 = vld [vmem:[#allocation5 + $0x1c8] sm:$0xff]
    %v126 = vld [vmem:[#allocation5 + $0x1d0] sm:$0xff]
    %v127 = vld [vmem:[#allocation5 + $0x1d8] sm:$0xff]
    %v128 = vld [vmem:[#allocation5 + $0x1e0] sm:$0xff]
    %v129 = vld [vmem:[#allocation5 + $0x1e8] sm:$0xff]
    %v130 = vld [vmem:[#allocation5 + $0x1f0] sm:$0xff]
    %v131 = vld [vmem:[#allocation5 + $0x1f8] sm:$0xff]
    %v132 = vld [vmem:[#allocation5 + $0x200] sm:$0xff]
    %v133 = vld [vmem:[#allocation5 + $0x208] sm:$0xff]
    %v134 = vld [vmem:[#allocation5 + $0x210] sm:$0xff]
    %v135 = vld [vmem:[#allocation5 + $0x218] sm:$0xff]
    %v136 = vld [vmem:[#allocation5 + $0x220] sm:$0xff]
    %v137 = vld [vmem:[#allocation5 + $0x228] sm:$0xff]
    %v138 = vld [vmem:[#allocation5 + $0x230] sm:$0xff]
    %v139 = vld [vmem:[#allocation5 + $0x238] sm:$0xff]
    %v140 = vld [vmem:[#allocation5 + $0x240] sm:$0xff]
    %v141 = vld [vmem:[#allocation5 + $0x248] sm:$0xff]
    %v142 = vld [vmem:[#allocation5 + $0x250] sm:$0xff]
    %v143 = vld [vmem:[#allocation5 + $0x258] sm:$0xff]
    %v144 = vld [vmem:[#allocation5 + $0x260] sm:$0xff]
    %v145 = vld [vmem:[#allocation5 + $0x268] sm:$0xff]
    %v146 = vld [vmem:[#allocation5 + $0x270] sm:$0xff]
    %v147 = vld [vmem:[#allocation5 + $0x278] sm:$0xff]
    %v148 = vld [vmem:[#allocation5 + $0x280] sm:$0xff]
    %v149 = vld [vmem:[#allocation5 + $0x288] sm:$0xff]
    %v150 = vld [vmem:[#allocation5 + $0x290] sm:$0xff]
    %v151 = vld [vmem:[#allocation5 + $0x298] sm:$0xff]
    %v152 = vld [vmem:[#allocation5 + $0x2a0] sm:$0xff]
    %v153 = vld [vmem:[#allocation5 + $0x2a8] sm:$0xff]
    %v154 = vld [vmem:[#allocation5 + $0x2b0] sm:$0xff]
    %v155 = vld [vmem:[#allocation5 + $0x2b8] sm:$0xff]
    %v156 = vld [vmem:[#allocation5 + $0x2c0] sm:$0xff]
    %v157 = vld [vmem:[#allocation5 + $0x2c8] sm:$0xff]
    %v158 = vld [vmem:[#allocation5 + $0x2d0] sm:$0xff]
    %v159 = vld [vmem:[#allocation5 + $0x2d8] sm:$0xff]
    %v160 = vld [vmem:[#allocation5 + $0x2e0] sm:$0xff]
    %v161 = vld [vmem:[#allocation5 + $0x2e8] sm:$0xff]
    %v162 = vld [vmem:[#allocation5 + $0x2f0] sm:$0xff]
    %v163 = vld [vmem:[#allocation5 + $0x2f8] sm:$0xff]
    %v164 = vld [vmem:[#allocation5 + $0x300] sm:$0xff]
    %v165 = vld [vmem:[#allocation5 + $0x308] sm:$0xff]
    %v166 = vld [vmem:[#allocation5 + $0x310] sm:$0xff]
    %v167 = vld [vmem:[#allocation5 + $0x318] sm:$0xff]
    %v168 = vld [vmem:[#allocation5 + $0x320] sm:$0xff]
    %v169 = vld [vmem:[#allocation5 + $0x328] sm:$0xff]
    %v170 = vld [vmem:[#allocation5 + $0x330] sm:$0xff]
    %v171 = vld [vmem:[#allocation5 + $0x338] sm:$0xff]
    %v172 = vld [vmem:[#allocation5 + $0x340] sm:$0xff]
    %v173 = vld [vmem:[#allocation5 + $0x348] sm:$0xff]
    %v174 = vld [vmem:[#allocation5 + $0x350] sm:$0xff]
    %v175 = vld [vmem:[#allocation5 + $0x358] sm:$0xff]
    %v176 = vld [vmem:[#allocation5 + $0x360] sm:$0xff]
    %v177 = vld [vmem:[#allocation5 + $0x368] sm:$0xff]
    %v178 = vld [vmem:[#allocation5 + $0x370] sm:$0xff]
    %v179 = vld [vmem:[#allocation5 + $0x378] sm:$0xff]
    %v180 = vld [vmem:[#allocation5 + $0x380] sm:$0xff]
    %v181 = vld [vmem:[#allocation5 + $0x388] sm:$0xff]
    %v182 = vld [vmem:[#allocation5 + $0x390] sm:$0xff]
    %v183 = vld [vmem:[#allocation5 + $0x398] sm:$0xff]
    %v184 = vld [vmem:[#allocation5 + $0x3a0] sm:$0xff]
    %v185 = vld [vmem:[#allocation5 + $0x3a8] sm:$0xff]
    %v186 = vld [vmem:[#allocation5 + $0x3b0] sm:$0xff]
    %v187 = vld [vmem:[#allocation5 + $0x3b8] sm:$0xff]
    %v188 = vld [vmem:[#allocation5 + $0x3c0] sm:$0xff]
    %v189 = vld [vmem:[#allocation5 + $0x3c8] sm:$0xff]
    %v190 = vld [vmem:[#allocation5 + $0x3d0] sm:$0xff]
    %v191 = vld [vmem:[#allocation5 + $0x3d8] sm:$0xff]
    %v192 = vld [vmem:[#allocation5 + $0x3e0] sm:$0xff]
    %v193 = vld [vmem:[#allocation5 + $0x3e8] sm:$0xff]
    %v194 = vld [vmem:[#allocation5 + $0x3f0] sm:$0xff]
    %v195 = vld [vmem:[#allocation5 + $0x3f8] sm:$0xff]
    %v196 = vld [vmem:[#allocation5 + $0x400] sm:$0xff]
    %v197 = vld [vmem:[#allocation5 + $0x408] sm:$0xff]
    %v198 = vld [vmem:[#allocation5 + $0x410] sm:$0xff]
    %v199 = vld [vmem:[#allocation5 + $0x418] sm:$0xff]
    %v200 = vld [vmem:[#allocation5 + $0x420] sm:$0xff]
    %v201 = vld [vmem:[#allocation5 + $0x428] sm:$0xff]
    %v202 = vld [vmem:[#allocation5 + $0x430] sm:$0xff]
    %v203 = vld [vmem:[#allocation5 + $0x438] sm:$0xff]
    %v204 = vld [vmem:[#allocation5 + $0x440] sm:$0xff]
    %v205 = vld [vmem:[#allocation5 + $0x448] sm:$0xff]
    %v206 = vld [vmem:[#allocation5 + $0x450] sm:$0xff]
    %v207 = vld [vmem:[#allocation5 + $0x458] sm:$0xff]
    %v208 = vld [vmem:[#allocation5 + $0x460] sm:$0xff]
    %v209 = vld [vmem:[#allocation5 + $0x468] sm:$0xff]
    %v210 = vld [vmem:[#allocation5 + $0x470] sm:$0xff]
    %v211 = vld [vmem:[#allocation5 + $0x478] sm:$0xff]
    %v212 = vld [vmem:[#allocation5 + $0x480] sm:$0xff]
    %v213 = vld [vmem:[#allocation5 + $0x488] sm:$0xff]
    %v214 = vld [vmem:[#allocation5 + $0x490] sm:$0xff]
    %v215 = vld [vmem:[#allocation5 + $0x498] sm:$0xff]
    %v216 = vld [vmem:[#allocation5 + $0x4a0] sm:$0xff]
    %v217 = vld [vmem:[#allocation5 + $0x4a8] sm:$0xff]
    %v218 = vld [vmem:[#allocation5 + $0x4b0] sm:$0xff]
    %v219 = vld [vmem:[#allocation5 + $0x4b8] sm:$0xff]
    %v220 = vld [vmem:[#allocation5 + $0x4c0] sm:$0xff]
    %v221 = vld [vmem:[#allocation5 + $0x4c8] sm:$0xff]
    %v222 = vld [vmem:[#allocation5 + $0x4d0] sm:$0xff]
    %v223 = vld [vmem:[#allocation5 + $0x4d8] sm:$0xff]
    %v224 = vld [vmem:[#allocation5 + $0x4e0] sm:$0xff]
    %v225 = vld [vmem:[#allocation5 + $0x4e8] sm:$0xff]
    %v226 = vld [vmem:[#allocation5 + $0x4f0] sm:$0xff]
    %v227 = vld [vmem:[#allocation5 + $0x4f8] sm:$0xff]
    %v228 = vld [vmem:[#allocation5 + $0x500] sm:$0xff]
    %v229 = vld [vmem:[#allocation5 + $0x508] sm:$0xff]
    %v230 = vld [vmem:[#allocation5 + $0x510] sm:$0xff]
    %v231 = vld [vmem:[#allocation5 + $0x518] sm:$0xff]
    %v232 = vld [vmem:[#allocation5 + $0x520] sm:$0xff]
    %v233 = vld [vmem:[#allocation5 + $0x528] sm:$0xff]
    %v234 = vld [vmem:[#allocation5 + $0x530] sm:$0xff]
    %v235 = vld [vmem:[#allocation5 + $0x538] sm:$0xff]
    %v236 = vld [vmem:[#allocation5 + $0x540] sm:$0xff]
    %v237 = vld [vmem:[#allocation5 + $0x548] sm:$0xff]
    %v238 = vld [vmem:[#allocation5 + $0x550] sm:$0xff]
    %v239 = vld [vmem:[#allocation5 + $0x558] sm:$0xff]
    %v240 = vld [vmem:[#allocation5 + $0x560] sm:$0xff]
    %v241 = vld [vmem:[#allocation5 + $0x568] sm:$0xff]
    %v242 = vld [vmem:[#allocation5 + $0x570] sm:$0xff]
    %v243 = vld [vmem:[#allocation5 + $0x578] sm:$0xff]
    %v244 = vld [vmem:[#allocation5 + $0x580] sm:$0xff]
    %v245 = vld [vmem:[#allocation5 + $0x588] sm:$0xff]
    %v246 = vld [vmem:[#allocation5 + $0x590] sm:$0xff]
    %v247 = vld [vmem:[#allocation5 + $0x598] sm:$0xff]
    %v248 = vld [vmem:[#allocation5 + $0x5a0] sm:$0xff]
    %v249 = vld [vmem:[#allocation5 + $0x5a8] sm:$0xff]
    %v250 = vld [vmem:[#allocation5 + $0x5b0] sm:$0xff]
    %v251 = vld [vmem:[#allocation5 + $0x5b8] sm:$0xff]
    %v252 = vld [vmem:[#allocation5 + $0x5c0] sm:$0xff]
    %v253 = vld [vmem:[#allocation5 + $0x5c8] sm:$0xff]
    %v254 = vld [vmem:[#allocation5 + $0x5d0] sm:$0xff]
    %v255 = vld [vmem:[#allocation5 + $0x5d8] sm:$0xff]
    %v256 = vld [vmem:[#allocation5 + $0x5e0] sm:$0xff]
    %v257 = vld [vmem:[#allocation5 + $0x5e8] sm:$0xff]
    %v258 = vld [vmem:[#allocation5 + $0x5f0] sm:$0xff]
    %v259 = vld [vmem:[#allocation5 + $0x5f8] sm:$0xff]
    %v260 = vld [vmem:[#allocation5 + $0x600] sm:$0xff]
    %v261 = vld [vmem:[#allocation5 + $0x608] sm:$0xff]
    %v262 = vld [vmem:[#allocation5 + $0x610] sm:$0xff]
    %v263 = vld [vmem:[#allocation5 + $0x618] sm:$0xff]
    %v264 = vld [vmem:[#allocation5 + $0x620] sm:$0xff]
    %v265 = vld [vmem:[#allocation5 + $0x628] sm:$0xff]
    %v266 = vld [vmem:[#allocation5 + $0x630] sm:$0xff]
    %v267 = vld [vmem:[#allocation5 + $0x638] sm:$0xff]
    %v268 = vld [vmem:[#allocation5 + $0x640] sm:$0xff]
    %v269 = vld [vmem:[#allocation5 + $0x648] sm:$0xff]
    %v270 = vld [vmem:[#allocation5 + $0x650] sm:$0xff]
    %v271 = vld [vmem:[#allocation5 + $0x658] sm:$0xff]
    %v272 = vld [vmem:[#allocation5 + $0x660] sm:$0xff]
    %v273 = vld [vmem:[#allocation5 + $0x668] sm:$0xff]
    %v274 = vld [vmem:[#allocation5 + $0x670] sm:$0xff]
    %v275 = vld [vmem:[#allocation5 + $0x678] sm:$0xff]
    %v276 = vld [vmem:[#allocation5 + $0x680] sm:$0xff]
    %v277 = vld [vmem:[#allocation5 + $0x688] sm:$0xff]
    %v278 = vld [vmem:[#allocation5 + $0x690] sm:$0xff]
    %v279 = vld [vmem:[#allocation5 + $0x698] sm:$0xff]
    %v280 = vld [vmem:[#allocation5 + $0x6a0] sm:$0xff]
    %v281 = vld [vmem:[#allocation5 + $0x6a8] sm:$0xff]
    %v282 = vld [vmem:[#allocation5 + $0x6b0] sm:$0xff]
    %v283 = vld [vmem:[#allocation5 + $0x6b8] sm:$0xff]
    %v284 = vld [vmem:[#allocation5 + $0x6c0] sm:$0xff]
    %v285 = vld [vmem:[#allocation5 + $0x6c8] sm:$0xff]
    %v286 = vld [vmem:[#allocation5 + $0x6d0] sm:$0xff]
    %v287 = vld [vmem:[#allocation5 + $0x6d8] sm:$0xff]
    %v288 = vld [vmem:[#allocation5 + $0x6e0] sm:$0xff]
    %v289 = vld [vmem:[#allocation5 + $0x6e8] sm:$0xff]
    %v290 = vld [vmem:[#allocation5 + $0x6f0] sm:$0xff]
    %v291 = vld [vmem:[#allocation5 + $0x6f8] sm:$0xff]
    %v292 = vld [vmem:[#allocation5 + $0x700] sm:$0xff]
    %v293 = vld [vmem:[#allocation5 + $0x708] sm:$0xff]
    %v294 = vld [vmem:[#allocation5 + $0x710] sm:$0xff]
    %v295 = vld [vmem:[#allocation5 + $0x718] sm:$0xff]
    %v296 = vld [vmem:[#allocation5 + $0x720] sm:$0xff]
    %v297 = vld [vmem:[#allocation5 + $0x728] sm:$0xff]
    %v298 = vld [vmem:[#allocation5 + $0x730] sm:$0xff]
    %v299 = vld [vmem:[#allocation5 + $0x738] sm:$0xff]
    %v300 = vld [vmem:[#allocation5 + $0x740] sm:$0xff]
    %v301 = vld [vmem:[#allocation5 + $0x748] sm:$0xff]
    %v302 = vld [vmem:[#allocation5 + $0x750] sm:$0xff]
    %v303 = vld [vmem:[#allocation5 + $0x758] sm:$0xff]
    %v304 = vld [vmem:[#allocation5 + $0x760] sm:$0xff]
    %v305 = vld [vmem:[#allocation5 + $0x768] sm:$0xff]
    %v306 = vld [vmem:[#allocation5 + $0x770] sm:$0xff]
    %v307 = vld [vmem:[#allocation5 + $0x778] sm:$0xff]
    %v308 = vld [vmem:[#allocation5 + $0x780] sm:$0xff]
    %v309 = vld [vmem:[#allocation5 + $0x788] sm:$0xff]
    %v310 = vld [vmem:[#allocation5 + $0x790] sm:$0xff]
    %v311 = vld [vmem:[#allocation5 + $0x798] sm:$0xff]
    %v312 = vld [vmem:[#allocation5 + $0x7a0] sm:$0xff]
    %v313 = vld [vmem:[#allocation5 + $0x7a8] sm:$0xff]
    %v314 = vld [vmem:[#allocation5 + $0x7b0] sm:$0xff]
    %v315 = vld [vmem:[#allocation5 + $0x7b8] sm:$0xff]
    %v316 = vld [vmem:[#allocation5 + $0x7c0] sm:$0xff]
    %v317 = vld [vmem:[#allocation5 + $0x7c8] sm:$0xff]
    %v318 = vld [vmem:[#allocation5 + $0x7d0] sm:$0xff]
    %v319 = vld [vmem:[#allocation5 + $0x7d8] sm:$0xff]
    %v320 = vld [vmem:[#allocation5 + $0x7e0] sm:$0xff]
    %v321 = vld [vmem:[#allocation5 + $0x7e8] sm:$0xff]
    %v322 = vld [vmem:[#allocation5 + $0x7f0] sm:$0xff]
    %v323 = vld [vmem:[#allocation5 + $0x7f8] sm:$0xff]
    %v324 = vld [vmem:[%s2] sm:$0x3]
    %v326 = vlaneseq
    %v327 = vshrl.u32 %v326, 7
    %v328 = vsub.s32 0, %v327
    %v329 = vrot.slane %v324, %v328
    %v330 = vlaneseq
    %v331 = vshrl.u32 %v330, 7
    %v332 = vsub.s32 1, %v331
    %v333 = vrot.slane %v324, %v332
    %336 = vmatprep.subr.mxu0 %v69
    %337 = vmatpush1.msra.mxu0 %v68
    %338 = vmatprep.subr.mxu0 %v71
    %339 = vmatpush1.msra.mxu0 %v70
    %340 = vmatprep.subr.mxu0 %v73
    %341 = vmatpush1.msra.mxu0 %v72
    %342 = vmatprep.subr.mxu0 %v75
    %343 = vmatpush1.msra.mxu0 %v74
    %344 = vmatprep.subr.mxu0 %v77
    %345 = vmatpush1.msra.mxu0 %v76
    %346 = vmatprep.subr.mxu0 %v79
    %347 = vmatpush1.msra.mxu0 %v78
    %348 = vmatprep.subr.mxu0 %v81
    %349 = vmatpush1.msra.mxu0 %v80
    %350 = vmatprep.subr.mxu0 %v83
    %351 = vmatpush1.msra.mxu0 %v82
    %352 = vmatprep.subr.mxu0 %v85
    %353 = vmatpush1.msra.mxu0 %v84
    %354 = vmatprep.subr.mxu0 %v87
    %355 = vmatpush1.msra.mxu0 %v86
    %356 = vmatprep.subr.mxu0 %v89
    %357 = vmatpush1.msra.mxu0 %v88
    %358 = vmatprep.subr.mxu0 %v91
    %359 = vmatpush1.msra.mxu0 %v90
    %360 = vmatprep.subr.mxu0 %v93
    %361 = vmatpush1.msra.mxu0 %v92
    %362 = vmatprep.subr.mxu0 %v95
    %363 = vmatpush1.msra.mxu0 %v94
    %364 = vmatprep.subr.mxu0 %v97
    %365 = vmatpush1.msra.mxu0 %v96
    %366 = vmatprep.subr.mxu0 %v99
    %367 = vmatpush1.msra.mxu0 %v98
    %368 = vmatprep.subr.mxu0 %v101
    %369 = vmatpush1.msra.mxu0 %v100
    %370 = vmatprep.subr.mxu0 %v103
    %371 = vmatpush1.msra.mxu0 %v102
    %372 = vmatprep.subr.mxu0 %v105
    %373 = vmatpush1.msra.mxu0 %v104
    %374 = vmatprep.subr.mxu0 %v107
    %375 = vmatpush1.msra.mxu0 %v106
    %376 = vmatprep.subr.mxu0 %v109
    %377 = vmatpush1.msra.mxu0 %v108
    %378 = vmatprep.subr.mxu0 %v111
    %379 = vmatpush1.msra.mxu0 %v110
    %380 = vmatprep.subr.mxu0 %v113
    %381 = vmatpush1.msra.mxu0 %v112
    %382 = vmatprep.subr.mxu0 %v115
    %383 = vmatpush1.msra.mxu0 %v114
    %384 = vmatprep.subr.mxu0 %v117
    %385 = vmatpush1.msra.mxu0 %v116
    %386 = vmatprep.subr.mxu0 %v119
    %387 = vmatpush1.msra.mxu0 %v118
    %388 = vmatprep.subr.mxu0 %v121
    %389 = vmatpush1.msra.mxu0 %v120
    %390 = vmatprep.subr.mxu0 %v123
    %391 = vmatpush1.msra.mxu0 %v122
    %392 = vmatprep.subr.mxu0 %v125
    %393 = vmatpush1.msra.mxu0 %v124
    %394 = vmatprep.subr.mxu0 %v127
    %395 = vmatpush1.msra.mxu0 %v126
    %396 = vmatprep.subr.mxu0 %v129
    %397 = vmatpush1.msra.mxu0 %v128
    %398 = vmatprep.subr.mxu0 %v131
    %399 = vmatpush1.msra.mxu0 %v130
    %400 = vmatprep.mubr.f32.mxu0 %v61
    %401 = vmatmul.mubr.f32.gmra.mrb[0].mxu0 %v60
    %v402 = vpop.f32.mrb[0].mxu0
    %v403 = vadd.f32 %v329, %v402
    %v404 = vpop.f32.mrb[0].mxu0
    %v405 = vadd.f32 %v333, %v404
    %406 = vdwg.mxu0
    %407 = vmatprep.subr.mxu0 %v133
    %408 = vmatpush1.msra.mxu0 %v132
    %409 = vmatprep.subr.mxu0 %v135
    %410 = vmatpush1.msra.mxu0 %v134
    %411 = vmatprep.subr.mxu0 %v137
    %412 = vmatpush1.msra.mxu0 %v136
    %413 = vmatprep.subr.mxu0 %v139
    %414 = vmatpush1.msra.mxu0 %v138
    %415 = vmatprep.subr.mxu0 %v141
    %416 = vmatpush1.msra.mxu0 %v140
    %417 = vmatprep.subr.mxu0 %v143
    %418 = vmatpush1.msra.mxu0 %v142
    %419 = vmatprep.subr.mxu0 %v145
    %420 = vmatpush1.msra.mxu0 %v144
    %421 = vmatprep.subr.mxu0 %v147
    %422 = vmatpush1.msra.mxu0 %v146
    %423 = vmatprep.subr.mxu0 %v149
    %424 = vmatpush1.msra.mxu0 %v148
    %425 = vmatprep.subr.mxu0 %v151
    %426 = vmatpush1.msra.mxu0 %v150
    %427 = vmatprep.subr.mxu0 %v153
    %428 = vmatpush1.msra.mxu0 %v152
    %429 = vmatprep.subr.mxu0 %v155
    %430 = vmatpush1.msra.mxu0 %v154
    %431 = vmatprep.subr.mxu0 %v157
    %432 = vmatpush1.msra.mxu0 %v156
    %433 = vmatprep.subr.mxu0 %v159
    %434 = vmatpush1.msra.mxu0 %v158
    %435 = vmatprep.subr.mxu0 %v161
    %436 = vmatpush1.msra.mxu0 %v160
    %437 = vmatprep.subr.mxu0 %v163
    %438 = vmatpush1.msra.mxu0 %v162
    %439 = vmatprep.subr.mxu0 %v165
    %440 = vmatpush1.msra.mxu0 %v164
    %441 = vmatprep.subr.mxu0 %v167
    %442 = vmatpush1.msra.mxu0 %v166
    %443 = vmatprep.subr.mxu0 %v169
    %444 = vmatpush1.msra.mxu0 %v168
    %445 = vmatprep.subr.mxu0 %v171
    %446 = vmatpush1.msra.mxu0 %v170
    %447 = vmatprep.subr.mxu0 %v173
    %448 = vmatpush1.msra.mxu0 %v172
    %449 = vmatprep.subr.mxu0 %v175
    %450 = vmatpush1.msra.mxu0 %v174
    %451 = vmatprep.subr.mxu0 %v177
    %452 = vmatpush1.msra.mxu0 %v176
    %453 = vmatprep.subr.mxu0 %v179
    %454 = vmatpush1.msra.mxu0 %v178
    %455 = vmatprep.subr.mxu0 %v181
    %456 = vmatpush1.msra.mxu0 %v180
    %457 = vmatprep.subr.mxu0 %v183
    %458 = vmatpush1.msra.mxu0 %v182
    %459 = vmatprep.subr.mxu0 %v185
    %460 = vmatpush1.msra.mxu0 %v184
    %461 = vmatprep.subr.mxu0 %v187
    %462 = vmatpush1.msra.mxu0 %v186
    %463 = vmatprep.subr.mxu0 %v189
    %464 = vmatpush1.msra.mxu0 %v188
    %465 = vmatprep.subr.mxu0 %v191
    %466 = vmatpush1.msra.mxu0 %v190
    %467 = vmatprep.subr.mxu0 %v193
    %468 = vmatpush1.msra.mxu0 %v192
    %469 = vmatprep.subr.mxu0 %v195
    %470 = vmatpush1.msra.mxu0 %v194
    %471 = vmatprep.mubr.f32.mxu0 %v63
    %472 = vmatmul.mubr.f32.gmra.mrb[0].mxu0 %v62
    %v473 = vpop.f32.mrb[0].mxu0
    %v474 = vadd.f32 %v403, %v473
    %v475 = vpop.f32.mrb[0].mxu0
    %v476 = vadd.f32 %v405, %v475
    %477 = vdwg.mxu0
    %478 = vmatprep.subr.mxu0 %v197
    %479 = vmatpush1.msra.mxu0 %v196
    %480 = vmatprep.subr.mxu0 %v199
    %481 = vmatpush1.msra.mxu0 %v198
    %482 = vmatprep.subr.mxu0 %v201
    %483 = vmatpush1.msra.mxu0 %v200
    %484 = vmatprep.subr.mxu0 %v203
    %485 = vmatpush1.msra.mxu0 %v202
    %486 = vmatprep.subr.mxu0 %v205
    %487 = vmatpush1.msra.mxu0 %v204
    %488 = vmatprep.subr.mxu0 %v207
    %489 = vmatpush1.msra.mxu0 %v206
    %490 = vmatprep.subr.mxu0 %v209
    %491 = vmatpush1.msra.mxu0 %v208
    %492 = vmatprep.subr.mxu0 %v211
    %493 = vmatpush1.msra.mxu0 %v210
    %494 = vmatprep.subr.mxu0 %v213
    %495 = vmatpush1.msra.mxu0 %v212
    %496 = vmatprep.subr.mxu0 %v215
    %497 = vmatpush1.msra.mxu0 %v214
    %498 = vmatprep.subr.mxu0 %v217
    %499 = vmatpush1.msra.mxu0 %v216
    %500 = vmatprep.subr.mxu0 %v219
    %501 = vmatpush1.msra.mxu0 %v218
    %502 = vmatprep.subr.mxu0 %v221
    %503 = vmatpush1.msra.mxu0 %v220
    %504 = vmatprep.subr.mxu0 %v223
    %505 = vmatpush1.msra.mxu0 %v222
    %506 = vmatprep.subr.mxu0 %v225
    %507 = vmatpush1.msra.mxu0 %v224
    %508 = vmatprep.subr.mxu0 %v227
    %509 = vmatpush1.msra.mxu0 %v226
    %510 = vmatprep.subr.mxu0 %v229
    %511 = vmatpush1.msra.mxu0 %v228
    %512 = vmatprep.subr.mxu0 %v231
    %513 = vmatpush1.msra.mxu0 %v230
    %514 = vmatprep.subr.mxu0 %v233
    %515 = vmatpush1.msra.mxu0 %v232
    %516 = vmatprep.subr.mxu0 %v235
    %517 = vmatpush1.msra.mxu0 %v234
    %518 = vmatprep.subr.mxu0 %v237
    %519 = vmatpush1.msra.mxu0 %v236
    %520 = vmatprep.subr.mxu0 %v239
    %521 = vmatpush1.msra.mxu0 %v238
    %522 = vmatprep.subr.mxu0 %v241
    %523 = vmatpush1.msra.mxu0 %v240
    %524 = vmatprep.subr.mxu0 %v243
    %525 = vmatpush1.msra.mxu0 %v242
    %526 = vmatprep.subr.mxu0 %v245
    %527 = vmatpush1.msra.mxu0 %v244
    %528 = vmatprep.subr.mxu0 %v247
    %529 = vmatpush1.msra.mxu0 %v246
    %530 = vmatprep.subr.mxu0 %v249
    %531 = vmatpush1.msra.mxu0 %v248
    %532 = vmatprep.subr.mxu0 %v251
    %533 = vmatpush1.msra.mxu0 %v250
    %534 = vmatprep.subr.mxu0 %v253
    %535 = vmatpush1.msra.mxu0 %v252
    %536 = vmatprep.subr.mxu0 %v255
    %537 = vmatpush1.msra.mxu0 %v254
    %538 = vmatprep.subr.mxu0 %v257
    %539 = vmatpush1.msra.mxu0 %v256
    %540 = vmatprep.subr.mxu0 %v259
    %541 = vmatpush1.msra.mxu0 %v258
    %542 = vmatprep.mubr.f32.mxu0 %v65
    %543 = vmatmul.mubr.f32.gmra.mrb[0].mxu0 %v64
    %v544 = vpop.f32.mrb[0].mxu0
    %v545 = vadd.f32 %v474, %v544
    %v546 = vpop.f32.mrb[0].mxu0
    %v547 = vadd.f32 %v476, %v546
    %548 = vdwg.mxu0
    %549 = vmatprep.subr.mxu0 %v261
    %550 = vmatpush1.msra.mxu0 %v260
    %551 = vmatprep.subr.mxu0 %v263
    %552 = vmatpush1.msra.mxu0 %v262
    %553 = vmatprep.subr.mxu0 %v265
    %554 = vmatpush1.msra.mxu0 %v264
    %555 = vmatprep.subr.mxu0 %v267
    %556 = vmatpush1.msra.mxu0 %v266
    %557 = vmatprep.subr.mxu0 %v269
    %558 = vmatpush1.msra.mxu0 %v268
    %559 = vmatprep.subr.mxu0 %v271
    %560 = vmatpush1.msra.mxu0 %v270
    %561 = vmatprep.subr.mxu0 %v273
    %562 = vmatpush1.msra.mxu0 %v272
    %563 = vmatprep.subr.mxu0 %v275
    %564 = vmatpush1.msra.mxu0 %v274
    %565 = vmatprep.subr.mxu0 %v277
    %566 = vmatpush1.msra.mxu0 %v276
    %567 = vmatprep.subr.mxu0 %v279
    %568 = vmatpush1.msra.mxu0 %v278
    %569 = vmatprep.subr.mxu0 %v281
    %570 = vmatpush1.msra.mxu0 %v280
    %571 = vmatprep.subr.mxu0 %v283
    %572 = vmatpush1.msra.mxu0 %v282
    %573 = vmatprep.subr.mxu0 %v285
    %574 = vmatpush1.msra.mxu0 %v284
    %575 = vmatprep.subr.mxu0 %v287
    %576 = vmatpush1.msra.mxu0 %v286
    %577 = vmatprep.subr.mxu0 %v289
    %578 = vmatpush1.msra.mxu0 %v288
    %579 = vmatprep.subr.mxu0 %v291
    %580 = vmatpush1.msra.mxu0 %v290
    %581 = vmatprep.subr.mxu0 %v293
    %582 = vmatpush1.msra.mxu0 %v292
    %583 = vmatprep.subr.mxu0 %v295
    %584 = vmatpush1.msra.mxu0 %v294
    %585 = vmatprep.subr.mxu0 %v297
    %586 = vmatpush1.msra.mxu0 %v296
    %587 = vmatprep.subr.mxu0 %v299
    %588 = vmatpush1.msra.mxu0 %v298
    %589 = vmatprep.subr.mxu0 %v301
    %590 = vmatpush1.msra.mxu0 %v300
    %591 = vmatprep.subr.mxu0 %v303
    %592 = vmatpush1.msra.mxu0 %v302
    %593 = vmatprep.subr.mxu0 %v305
    %594 = vmatpush1.msra.mxu0 %v304
    %595 = vmatprep.subr.mxu0 %v307
    %596 = vmatpush1.msra.mxu0 %v306
    %597 = vmatprep.subr.mxu0 %v309
    %598 = vmatpush1.msra.mxu0 %v308
    %599 = vmatprep.subr.mxu0 %v311
    %600 = vmatpush1.msra.mxu0 %v310
    %601 = vmatprep.subr.mxu0 %v313
    %602 = vmatpush1.msra.mxu0 %v312
    %603 = vmatprep.subr.mxu0 %v315
    %604 = vmatpush1.msra.mxu0 %v314
    %605 = vmatprep.subr.mxu0 %v317
    %606 = vmatpush1.msra.mxu0 %v316
    %607 = vmatprep.subr.mxu0 %v319
    %608 = vmatpush1.msra.mxu0 %v318
    %609 = vmatprep.subr.mxu0 %v321
    %610 = vmatpush1.msra.mxu0 %v320
    %611 = vmatprep.subr.mxu0 %v323
    %612 = vmatpush1.msra.mxu0 %v322
    %613 = vmatprep.mubr.f32.mxu0 %v67
    %614 = vmatmul.mubr.f32.gmra.mrb[0].mxu0 %v66
    %v615 = vpop.f32.mrb[0].mxu0
    %v616 = vadd.f32 %v545, %v615
    %v617 = vpop.f32.mrb[0].mxu0
    %v618 = vadd.f32 %v547, %v617
    %619 = vdwg.mxu0
    %v620 = vmax.f32 %v616, 0.0
    %v621 = vmax.f32 %v618, 0.0
    %v622 = vld [vmem:[#allocation7] sm:$0xff]
    %v623 = vld [vmem:[#allocation7 + $0x8] sm:$0xff]
    %v624 = vld [vmem:[#allocation7 + $0x10] sm:$0xff]
    %v625 = vld [vmem:[#allocation7 + $0x18] sm:$0xff]
    %v626 = vld [vmem:[#allocation7 + $0x20] sm:$0xff]
    %v627 = vld [vmem:[#allocation7 + $0x28] sm:$0xff]
    %v628 = vld [vmem:[#allocation7 + $0x30] sm:$0xff]
    %v629 = vld [vmem:[#allocation7 + $0x38] sm:$0xff]
    %v630 = vld [vmem:[#allocation7 + $0x40] sm:$0xff]
    %v631 = vld [vmem:[#allocation7 + $0x48] sm:$0xff]
    %v632 = vld [vmem:[#allocation7 + $0x50] sm:$0xff]
    %v633 = vld [vmem:[#allocation7 + $0x58] sm:$0xff]
    %v634 = vld [vmem:[#allocation7 + $0x60] sm:$0xff]
    %v635 = vld [vmem:[#allocation7 + $0x68] sm:$0xff]
    %v636 = vld [vmem:[#allocation7 + $0x70] sm:$0xff]
    %v637 = vld [vmem:[#allocation7 + $0x78] sm:$0xff]
    %v638 = vld [vmem:[#allocation7 + $0x80] sm:$0xff]
    %v639 = vld [vmem:[#allocation7 + $0x88] sm:$0xff]
    %v640 = vld [vmem:[#allocation7 + $0x90] sm:$0xff]
    %v641 = vld [vmem:[#allocation7 + $0x98] sm:$0xff]
    %v642 = vld [vmem:[#allocation7 + $0xa0] sm:$0xff]
    %v643 = vld [vmem:[#allocation7 + $0xa8] sm:$0xff]
    %v644 = vld [vmem:[#allocation7 + $0xb0] sm:$0xff]
    %v645 = vld [vmem:[#allocation7 + $0xb8] sm:$0xff]
    %v646 = vld [vmem:[#allocation7 + $0xc0] sm:$0xff]
    %v647 = vld [vmem:[#allocation7 + $0xc8] sm:$0xff]
    %v648 = vld [vmem:[#allocation7 + $0xd0] sm:$0xff]
    %v649 = vld [vmem:[#allocation7 + $0xd8] sm:$0xff]
    %v650 = vld [vmem:[#allocation7 + $0xe0] sm:$0xff]
    %v651 = vld [vmem:[#allocation7 + $0xe8] sm:$0xff]
    %v652 = vld [vmem:[#allocation7 + $0xf0] sm:$0xff]
    %v653 = vld [vmem:[#allocation7 + $0xf8] sm:$0xff]
    %v654 = vld [vmem:[%s4] sm:$0x1]
    %v656 = vlaneseq
    %v657 = vshrl.u32 %v656, 7
    %v658 = vsub.s32 0, %v657
    %v659 = vrot.slane %v654, %v658
    %661 = vmatprep.subr.mxu0 0.0
    %662 = vmatpush1.msra.mxu0 %v622
    %663 = vmatprep.subr.mxu0 0.0
    %664 = vmatpush1.msra.mxu0 %v623
    %665 = vmatprep.subr.mxu0 0.0
    %666 = vmatpush1.msra.mxu0 %v624
    %667 = vmatprep.subr.mxu0 0.0
    %668 = vmatpush1.msra.mxu0 %v625
    %669 = vmatprep.subr.mxu0 0.0
    %670 = vmatpush1.msra.mxu0 %v626
    %671 = vmatprep.subr.mxu0 0.0
    %672 = vmatpush1.msra.mxu0 %v627
    %673 = vmatprep.subr.mxu0 0.0
    %674 = vmatpush1.msra.mxu0 %v628
    %675 = vmatprep.subr.mxu0 0.0
    %676 = vmatpush1.msra.mxu0 %v629
    %677 = vmatprep.subr.mxu0 0.0
    %678 = vmatpush1.msra.mxu0 %v630
    %679 = vmatprep.subr.mxu0 0.0
    %680 = vmatpush1.msra.mxu0 %v631
    %681 = vmatprep.subr.mxu0 0.0
    %682 = vmatpush1.msra.mxu0 %v632
    %683 = vmatprep.subr.mxu0 0.0
    %684 = vmatpush1.msra.mxu0 %v633
    %685 = vmatprep.subr.mxu0 0.0
    %686 = vmatpush1.msra.mxu0 %v634
    %687 = vmatprep.subr.mxu0 0.0
    %688 = vmatpush1.msra.mxu0 %v635
    %689 = vmatprep.subr.mxu0 0.0
    %690 = vmatpush1.msra.mxu0 %v636
    %691 = vmatprep.subr.mxu0 0.0
    %692 = vmatpush1.msra.mxu0 %v637
    %693 = vmatprep.subr.mxu0 0.0
    %694 = vmatpush1.msra.mxu0 %v638
    %695 = vmatprep.subr.mxu0 0.0
    %696 = vmatpush1.msra.mxu0 %v639
    %697 = vmatprep.subr.mxu0 0.0
    %698 = vmatpush1.msra.mxu0 %v640
    %699 = vmatprep.subr.mxu0 0.0
    %700 = vmatpush1.msra.mxu0 %v641
    %701 = vmatprep.subr.mxu0 0.0
    %702 = vmatpush1.msra.mxu0 %v642
    %703 = vmatprep.subr.mxu0 0.0
    %704 = vmatpush1.msra.mxu0 %v643
    %705 = vmatprep.subr.mxu0 0.0
    %706 = vmatpush1.msra.mxu0 %v644
    %707 = vmatprep.subr.mxu0 0.0
    %708 = vmatpush1.msra.mxu0 %v645
    %709 = vmatprep.subr.mxu0 0.0
    %710 = vmatpush1.msra.mxu0 %v646
    %711 = vmatprep.subr.mxu0 0.0
    %712 = vmatpush1.msra.mxu0 %v647
    %713 = vmatprep.subr.mxu0 0.0
    %714 = vmatpush1.msra.mxu0 %v648
    %715 = vmatprep.subr.mxu0 0.0
    %716 = vmatpush1.msra.mxu0 %v649
    %717 = vmatprep.subr.mxu0 0.0
    %718 = vmatpush1.msra.mxu0 %v650
    %719 = vmatprep.subr.mxu0 0.0
    %720 = vmatpush1.msra.mxu0 %v651
    %721 = vmatprep.subr.mxu0 0.0
    %722 = vmatpush1.msra.mxu0 %v652
    %723 = vmatprep.subr.mxu0 0.0
    %724 = vmatpush1.msra.mxu0 %v653
    %725 = vmatprep.mubr.f32.mxu0 %v621
    %726 = vmatmul.mubr.f32.gmra.mrb[0].mxu0 %v620
    %v727 = vpop.f32.mrb[0].mxu0
    %v728 = vadd.f32 %v659, %v727
    %v729 = vpop.f32.mrb[0].mxu0
    %730 = vdwg.mxu0
    %731 = vst [vmem:[#allocation8] sm:$0xff] %v728
    // Predicated region
    $region34: #{tpu_custom_call.1} parent=1 // pred_check
      _
    $region35: #{tpu_custom_call.1} parent=1 // pred_check_branch
      %733 = sbr.rel (0) target = $region37
    $region36: #{tpu_custom_call.1} parent=1 // pred_region
      %s735 = ssub.s32 128, 128
      %736 = vsyncadd [#allocation4], %s735
      %s738 = sshll.u32 [#allocation8], 4
      %s739 = int_to_ptr.vmem [resolvable:$true] %s738
      %741 = dma.vmem_to_hbm [thread:$0]  %s739, 128, %s5, [#allocation4]
    $region37: #{tpu_custom_call.1} parent=1 // pred_fallthru
      _
    // Predicated region
    $region38: #{tpu_custom_call.1} parent=1 // pred_check
      _
    $region39: #{tpu_custom_call.1} parent=1 // pred_check_branch
      %743 = sbr.rel (0) target = $region41
    $region40: #{tpu_custom_call.1} parent=1 // pred_region
      %744 = dma.done [#allocation4], 128
    $region41: #{tpu_custom_call.1} parent=1 // pred_fallthru
      _
    %745 = vsyncpa [#allocation3], 1
    %746 = vsyncpa [#allocation6], 1
    %747 = vsyncpa [#allocation4], 1

</llo_original>
